<compile_context>
chip_gen: v5e
topology: v5e:2x2
jax: 0.10.0
libtpu: 0.0.40
codegen_flags: <defaults>
</compile_context>

<pallas_src>
import jax
import jax.numpy as jnp
from jax.experimental import pallas as pl
from jax.experimental.pallas import tpu as pltpu


# ------------------------------ fused kernel ---------------------------------
def _fused_forward_kernel(w1_ref, b1_ref, w2_ref, b2_ref, w3_ref, b3_ref,
                          x_ref, u1_ref, u2_ref, u3_ref, out_ref):
    n, ci, h, w = x_ref.shape            # e.g. (2, 3, 16, 4)
    h1, w1o = h - 1, w - 1               # conv1 output spatial
    h2, w2o = h1 - 1, w1o - 1            # conv2 output spatial
    co1, co2, kk = 2, 2, 2               # conv out-channels, 2x2 kernels

    x = x_ref[...]

    # ---- conv1: Conv2d(3, 2, 2) as shifted-slice scalar*tensor MACs (VPU only) ----
    y1 = []
    for oc in range(co1):
        acc = b1_ref[oc]
        for c in range(ci):
            for kh in range(kk):
                for kw in range(kk):
                    wsc = w1_ref[((oc * ci + c) * kk + kh) * kk + kw]
                    acc = acc + wsc * x[:, c, kh:kh + h1, kw:kw + w1o]
        y1.append(acc)                                  # (n, h1, w1o)

    # ---- nn.Dropout(p=0.1), training mode ----
    u1 = u1_ref[...]                                    # (n, co1, h1, w1o) uniforms
    y1 = [jnp.where(u1[:, oc] >= 0.1, y1[oc] * (1.0 / 0.9), 0.0)
          for oc in range(co1)]

    # ---- conv2: Conv2d(6, 2, 2) ----
    # TODO(synk): the original module is shape-inconsistent (conv2 declares 6 input
    # channels but receives 2); we use the first 2 input-channel slices of its weight.
    y2 = []
    for oc in range(co2):
        acc = b2_ref[oc]
        for c in range(co1):
            for kh in range(kk):
                for kw in range(kk):
                    wsc = w2_ref[((oc * co1 + c) * kk + kh) * kk + kw]
                    acc = acc + wsc * y1[c][:, kh:kh + h2, kw:kw + w2o]
        y2.append(acc)                                  # (n, h2, w2o)
    # torch.rand_like below discards y2's *values* (only its shape survives), so the
    # conv chain above is dead compute and is removed by compiler DCE.
    del y2

    # ---- torch.rand_like -> F.dropout(p=0.5, training) -> Linear(2, 3) ----
    # Lane-dense layout: r[k, m] with m = flattened (n, channel, h2) on the lane axis.
    r = u2_ref[...]                                     # (w2o, M) rand_like values
    r = jnp.where(u3_ref[...] >= 0.5, r * 2.0, 0.0)     # dropout p=0.5 -> scale 2
    rows = []
    for j in range(3):                                  # Linear out_features = 3
        row = b3_ref[j]
        for k in range(w2o):                            # Linear in_features = 2
            row = row + w3_ref[j * w2o + k] * r[k:k + 1, :]
        rows.append(row)                                # (1, M)
    out_ref[...] = jnp.concatenate(rows, axis=0)        # (3, M)


# ------------------------------ host wrapper ----------------------------------
_SMEM = pl.BlockSpec(memory_space=pltpu.MemorySpace.SMEM)
_VMEM = pl.BlockSpec(memory_space=pltpu.MemorySpace.VMEM)


@jax.jit
def model_forward(x, params, key):
    w1, b1, w2, b2, w3, b3 = params
    n, ci, h, w = x.shape
    h1, w1o = h - 1, w - 1
    h2, w2o = h1 - 1, w1o - 1
    assert w2o == 2, "Linear(2, 3) over the last axis requires input W == 4"
    m = n * 2 * h2                          # flattened (n, out_channel, h2) positions

    # Host-side (jax.random) uniforms; distributionally equivalent to torch's RNG.
    # TODO(synk): not bit-comparable to torch.Generator draws.
    k1, k2, k3 = jax.random.split(key, 3)
    u1 = jax.random.uniform(k1, (n, 2, h1, w1o), jnp.float32)   # Dropout(0.1) draw
    u2 = jax.random.uniform(k2, (w2o, m), jnp.float32)          # torch.rand_like values
    u3 = jax.random.uniform(k3, (w2o, m), jnp.float32)          # F.dropout(0.5) draw

    out_t = pl.pallas_call(
        _fused_forward_kernel,
        out_shape=jax.ShapeDtypeStruct((3, m), jnp.float32),
        in_specs=[_SMEM] * 6 + [_VMEM] * 4,
        out_specs=_VMEM,
    )(w1.reshape(-1), b1, w2[:, :2].reshape(-1), b2, w3.reshape(-1), b3,
      x, u1, u2, u3)

    # (3, M) lane-dense slab -> PyTorch layout (N, 2, H-2, 3)
    return out_t.T.reshape(n, 2, h2, 3)


def init_params(key):
    k1, k2, k3, k4, k5, k6 = jax.random.split(key, 6)

    def u(k, shape, fan_in):
        bound = 1.0 / (float(fan_in) ** 0.5)
        return jax.random.uniform(k, shape, jnp.float32, -bound, bound)

    w1 = u(k1, (2, 3, 2, 2), 3 * 2 * 2)
    b1 = u(k2, (2,), 3 * 2 * 2)
    w2 = u(k3, (2, 6, 2, 2), 6 * 2 * 2)
    b2 = u(k4, (2,), 6 * 2 * 2)
    w3 = u(k5, (3, 2), 2)
    b3 = u(k6, (3,), 2)
    return (w1, b1, w2, b2, w3, b3)


if __name__ == "__main__":
    key = jax.random.PRNGKey(0)
    kx, kp, kd = jax.random.split(key, 3)
    # Input consistent with the module: Linear(2,3) over the last axis forces W=4.
    x = jax.random.normal(kx, (2, 3, 16, 4), jnp.float32)
    params = init_params(kp)

    out = jax.block_until_ready(model_forward(x, params, kd))
    assert out.shape == (2, 2, 14, 3), out.shape
    assert out.dtype == jnp.float32
    assert bool(jnp.all(jnp.isfinite(out)))
    print("KERNEL_OK")
</pallas_src>

<mosaic_0001>
module attributes {stable_mosaic.version = 11 : i64} {
  func.func @_fused_forward_kernel(%arg0: memref<24xf32, #tpu.memory_space<smem>>, %arg1: memref<2xf32, #tpu.memory_space<smem>>, %arg2: memref<16xf32, #tpu.memory_space<smem>>, %arg3: memref<2xf32, #tpu.memory_space<smem>>, %arg4: memref<6xf32, #tpu.memory_space<smem>>, %arg5: memref<3xf32, #tpu.memory_space<smem>>, %arg6: memref<2x3x16x4xf32, #tpu.memory_space<vmem>>, %arg7: memref<2x2x15x3xf32, #tpu.memory_space<vmem>>, %arg8: memref<2x56xf32, #tpu.memory_space<vmem>>, %arg9: memref<2x56xf32, #tpu.memory_space<vmem>>, %arg10: memref<3x56xf32, #tpu.memory_space<vmem>>) attributes {dimension_semantics = [], scalar_prefetch = 0 : i64, scratch_operands = 0 : i64, tpu.core_type = #tpu.core_type<tc>} {
    %c0 = arith.constant 0 : index
    %c0_0 = arith.constant 0 : index
    %0 = vector.load %arg8[%c0, %c0_0] : memref<2x56xf32, #tpu.memory_space<vmem>>, vector<2x56xf32>
    %c0_1 = arith.constant 0 : index
    %c0_2 = arith.constant 0 : index
    %1 = vector.load %arg9[%c0_1, %c0_2] : memref<2x56xf32, #tpu.memory_space<vmem>>, vector<2x56xf32>
    %cst = arith.constant 5.000000e-01 : f32
    %2 = vector.broadcast %cst : f32 to vector<2x56xf32>
    %3 = arith.cmpf oge, %1, %2 : vector<2x56xf32>
    %cst_3 = arith.constant 2.000000e+00 : f32
    %4 = vector.broadcast %cst_3 : f32 to vector<2x56xf32>
    %5 = arith.mulf %0, %4 : vector<2x56xf32>
    %cst_4 = arith.constant 0.000000e+00 : f32
    %6 = vector.broadcast %cst_4 : f32 to vector<2x56xf32>
    %7 = arith.select %3, %5, %6 : vector<2x56xi1>, vector<2x56xf32>
    %c0_5 = arith.constant 0 : index
    %8 = memref.load %arg5[%c0_5] : memref<3xf32, #tpu.memory_space<smem>>
    %c0_6 = arith.constant 0 : index
    %9 = memref.load %arg4[%c0_6] : memref<6xf32, #tpu.memory_space<smem>>
    %10 = vector.extract_strided_slice %7 {offsets = [0, 0], sizes = [1, 56], strides = [1, 1]} : vector<2x56xf32> to vector<1x56xf32>
    %11 = vector.broadcast %9 : f32 to vector<1x56xf32>
    %12 = arith.mulf %11, %10 : vector<1x56xf32>
    %13 = vector.broadcast %8 : f32 to vector<1x56xf32>
    %14 = arith.addf %13, %12 : vector<1x56xf32>
    %c1 = arith.constant 1 : index
    %15 = memref.load %arg4[%c1] : memref<6xf32, #tpu.memory_space<smem>>
    %16 = vector.extract_strided_slice %7 {offsets = [1, 0], sizes = [1, 56], strides = [1, 1]} : vector<2x56xf32> to vector<1x56xf32>
    %17 = vector.broadcast %15 : f32 to vector<1x56xf32>
    %18 = arith.mulf %17, %16 : vector<1x56xf32>
    %19 = arith.addf %14, %18 : vector<1x56xf32>
    %c1_7 = arith.constant 1 : index
    %20 = memref.load %arg5[%c1_7] : memref<3xf32, #tpu.memory_space<smem>>
    %c2 = arith.constant 2 : index
    %21 = memref.load %arg4[%c2] : memref<6xf32, #tpu.memory_space<smem>>
    %22 = vector.extract_strided_slice %7 {offsets = [0, 0], sizes = [1, 56], strides = [1, 1]} : vector<2x56xf32> to vector<1x56xf32>
    %23 = vector.broadcast %21 : f32 to vector<1x56xf32>
    %24 = arith.mulf %23, %22 : vector<1x56xf32>
    %25 = vector.broadcast %20 : f32 to vector<1x56xf32>
    %26 = arith.addf %25, %24 : vector<1x56xf32>
    %c3 = arith.constant 3 : index
    %27 = memref.load %arg4[%c3] : memref<6xf32, #tpu.memory_space<smem>>
    %28 = vector.extract_strided_slice %7 {offsets = [1, 0], sizes = [1, 56], strides = [1, 1]} : vector<2x56xf32> to vector<1x56xf32>
    %29 = vector.broadcast %27 : f32 to vector<1x56xf32>
    %30 = arith.mulf %29, %28 : vector<1x56xf32>
    %31 = arith.addf %26, %30 : vector<1x56xf32>
    %c2_8 = arith.constant 2 : index
    %32 = memref.load %arg5[%c2_8] : memref<3xf32, #tpu.memory_space<smem>>
    %c4 = arith.constant 4 : index
    %33 = memref.load %arg4[%c4] : memref<6xf32, #tpu.memory_space<smem>>
    %34 = vector.extract_strided_slice %7 {offsets = [0, 0], sizes = [1, 56], strides = [1, 1]} : vector<2x56xf32> to vector<1x56xf32>
    %35 = vector.broadcast %33 : f32 to vector<1x56xf32>
    %36 = arith.mulf %35, %34 : vector<1x56xf32>
    %37 = vector.broadcast %32 : f32 to vector<1x56xf32>
    %38 = arith.addf %37, %36 : vector<1x56xf32>
    %c5 = arith.constant 5 : index
    %39 = memref.load %arg4[%c5] : memref<6xf32, #tpu.memory_space<smem>>
    %40 = vector.extract_strided_slice %7 {offsets = [1, 0], sizes = [1, 56], strides = [1, 1]} : vector<2x56xf32> to vector<1x56xf32>
    %41 = vector.broadcast %39 : f32 to vector<1x56xf32>
    %42 = arith.mulf %41, %40 : vector<1x56xf32>
    %43 = arith.addf %38, %42 : vector<1x56xf32>
    %44 = tpu.concatenate %19, %31, %43 in 0 : vector<1x56xf32>, vector<1x56xf32>, vector<1x56xf32> -> vector<3x56xf32>
    %c0_9 = arith.constant 0 : index
    %c0_10 = arith.constant 0 : index
    %45 = vector.load %arg10[%c0_9, %c0_10] : memref<3x56xf32, #tpu.memory_space<vmem>>, vector<3x56xf32>
    tpu.vector_store %arg10[%c0_9, %c0_10], %44 {strides = array<i32>} : memref<3x56xf32, #tpu.memory_space<vmem>>, vector<3x56xf32>,
    return
  }
}

</mosaic_0001>

<llo_original>
// kernel: model_forward.3
$region0: #{model_forward.3}
  #allocation0 [shape = 'u32[]', space=smem, size = 0x4, offset = 0x4, fixed_abs, tag = 'smem constant byte address 0x4 - core index']
  #allocation1 [shape = 'u32[72,128]{1,0:T(1,128)}', space=vmem, size = 0x9000, scoped, tag = 'internal scratch']
  %s0 = inlined_call_operand.vmem [shape: f32[24], index: 0, kind: input, shape index: {}]
  %s1 = inlined_call_operand.vmem [shape: f32[2], index: 1, kind: input, shape index: {}]
  %s2 = inlined_call_operand.vmem [shape: f32[16], index: 2, kind: input, shape index: {}]
  %s3 = inlined_call_operand.vmem [shape: f32[2], index: 3, kind: input, shape index: {}]
  %s4 = inlined_call_operand.vmem [shape: f32[6], index: 4, kind: input, shape index: {}]
  %s5 = inlined_call_operand.vmem [shape: f32[3], index: 5, kind: input, shape index: {}]
  %s6 = inlined_call_operand.vmem [shape: f32[2,3,16,4], index: 6, kind: input, shape index: {}]
  %s7 = inlined_call_operand.vmem [shape: f32[2,2,15,3], index: 7, kind: input, shape index: {}]
  %s8 = inlined_call_operand.vmem [shape: f32[2,56], index: 8, kind: input, shape index: {}]
  %s9 = inlined_call_operand.vmem [shape: f32[2,56], index: 9, kind: input, shape index: {}]
  %s10 = inlined_call_operand.vmem [shape: f32[3,56], index: 10, kind: output, shape index: {}]
  %s11 = sld [smem:[#allocation0]]
  $region74: #{model_forward.3} parent=0
    _
  %s13 = ssub.s32 1, %s11
  %s14 = scalar_select 0, %s13, %s11
  $region1: #{model_forward.3} parent=0
    #allocation2 [shape = 'u8[512]{0}', space=smem, size = 0x200, scoped, tag = 'input window, operand 0, single buffered']
    #allocation3 [shape = 's32[1]{0}', space=sflag, size = 0x4, scoped, tag = 'scoped memory for model_forward.3']
    #allocation4 [shape = 'u8[512]{0}', space=smem, size = 0x200, scoped, tag = 'input window, operand 1, single buffered']
    #allocation5 [shape = 's32[1]{0}', space=sflag, size = 0x4, scoped, tag = 'scoped memory for model_forward.3']
    #allocation6 [shape = 'u8[512]{0}', space=smem, size = 0x200, scoped, tag = 'input window, operand 2, single buffered']
    #allocation7 [shape = 'u8[512]{0}', space=smem, size = 0x200, scoped, tag = 'input window, operand 3, single buffered']
    #allocation8 [shape = 's32[1]{0}', space=sflag, size = 0x4, scoped, tag = 'scoped memory for model_forward.3']
    #allocation9 [shape = 'u8[512]{0}', space=smem, size = 0x200, scoped, tag = 'input window, operand 4, single buffered']
    #allocation10 [shape = 'u8[512]{0}', space=smem, size = 0x200, scoped, tag = 'input window, operand 5, single buffered']
    #allocation11 [shape = 's32[1]{0}', space=sflag, size = 0x4, scoped, tag = 'scoped memory for model_forward.3']
    %15 = vsyncpa [#allocation3], 0
    %16 = vsyncpa [#allocation5], 0
    %17 = vsyncpa [#allocation8], 0
    %18 = vsyncpa [#allocation11], 0
    // Predicated region
    $region2: #{model_forward.3} parent=1 // pred_check
      _
    $region3: #{model_forward.3} parent=1 // pred_check_branch
      %20 = sbr.rel (0) target = $region5
    $region4: #{model_forward.3} parent=1 // pred_region
      %22 = vsyncadd [#allocation3], 0
      %s24 = sshll.u32 %s0, 4
      %s25 = int_to_ptr.vmem [resolvable:$true] %s24
      %27 = dma.vmem_to_smem %s25, 16, [#allocation2], [#allocation3]
    $region5: #{model_forward.3} parent=1 // pred_fallthru
      _
    // Predicated region
    $region6: #{model_forward.3} parent=1 // pred_check
      _
    $region7: #{model_forward.3} parent=1 // pred_check_branch
      %29 = sbr.rel (0) target = $region9
    $region8: #{model_forward.3} parent=1 // pred_region
      %31 = vsyncadd [#allocation5], 0
      %s33 = sshll.u32 %s1, 4
      %s34 = int_to_ptr.vmem [resolvable:$true] %s33
      %36 = dma.vmem_to_smem %s34, 16, [#allocation4], [#allocation5]
    $region9: #{model_forward.3} parent=1 // pred_fallthru
      _
    // Predicated region
    $region10: #{model_forward.3} parent=1 // pred_check
      _
    $region11: #{model_forward.3} parent=1 // pred_check_branch
      %38 = sbr.rel (0) target = $region13
    $region12: #{model_forward.3} parent=1 // pred_region
      %40 = vsyncadd [#allocation5], 0
      %s42 = sshll.u32 %s2, 4
      %s43 = int_to_ptr.vmem [resolvable:$true] %s42
      %45 = dma.vmem_to_smem %s43, 16, [#allocation6], [#allocation5]
    $region13: #{model_forward.3} parent=1 // pred_fallthru
      _
    // Predicated region
    $region14: #{model_forward.3} parent=1 // pred_check
      _
    $region15: #{model_forward.3} parent=1 // pred_check_branch
      %47 = sbr.rel (0) target = $region17
    $region16: #{model_forward.3} parent=1 // pred_region
      %49 = vsyncadd [#allocation8], 0
      %s51 = sshll.u32 %s3, 4
      %s52 = int_to_ptr.vmem [resolvable:$true] %s51
      %54 = dma.vmem_to_smem %s52, 16, [#allocation7], [#allocation8]
    $region17: #{model_forward.3} parent=1 // pred_fallthru
      _
    // Predicated region
    $region18: #{model_forward.3} parent=1 // pred_check
      _
    $region19: #{model_forward.3} parent=1 // pred_check_branch
      %56 = sbr.rel (0) target = $region21
    $region20: #{model_forward.3} parent=1 // pred_region
      %58 = vsyncadd [#allocation8], 0
      %s60 = sshll.u32 %s4, 4
      %s61 = int_to_ptr.vmem [resolvable:$true] %s60
      %63 = dma.vmem_to_smem %s61, 16, [#allocation9], [#allocation8]
    $region21: #{model_forward.3} parent=1 // pred_fallthru
      _
    // Predicated region
    $region22: #{model_forward.3} parent=1 // pred_check
      _
    $region23: #{model_forward.3} parent=1 // pred_check_branch
      %65 = sbr.rel (0) target = $region25
    $region24: #{model_forward.3} parent=1 // pred_region
      %67 = vsyncadd [#allocation11], 0
      %s69 = sshll.u32 %s5, 4
      %s70 = int_to_ptr.vmem [resolvable:$true] %s69
      %72 = dma.vmem_to_smem %s70, 16, [#allocation10], [#allocation11]
    $region25: #{model_forward.3} parent=1 // pred_fallthru
      _
    // Predicated region
    $region26: #{model_forward.3} parent=1 // pred_check
      _
    $region27: #{model_forward.3} parent=1 // pred_check_branch
      %74 = sbr.rel (0) target = $region29
    $region28: #{model_forward.3} parent=1 // pred_region
      _
    $region29: #{model_forward.3} parent=1 // pred_fallthru
      _
    // Predicated region
    $region30: #{model_forward.3} parent=1 // pred_check
      _
    $region31: #{model_forward.3} parent=1 // pred_check_branch
      %76 = sbr.rel (0) target = $region33
    $region32: #{model_forward.3} parent=1 // pred_region
      _
    $region33: #{model_forward.3} parent=1 // pred_fallthru
      _
    // Predicated region
    $region34: #{model_forward.3} parent=1 // pred_check
      _
    $region35: #{model_forward.3} parent=1 // pred_check_branch
      %78 = sbr.rel (0) target = $region37
    $region36: #{model_forward.3} parent=1 // pred_region
      _
    $region37: #{model_forward.3} parent=1 // pred_fallthru
      _
    // Predicated region
    $region38: #{model_forward.3} parent=1 // pred_check
      _
    $region39: #{model_forward.3} parent=1 // pred_check_branch
      %80 = sbr.rel (0) target = $region41
    $region40: #{model_forward.3} parent=1 // pred_region
      _
    $region41: #{model_forward.3} parent=1 // pred_fallthru
      _
    // Predicated region
    $region42: #{model_forward.3} parent=1 // pred_check
      _
    $region43: #{model_forward.3} parent=1 // pred_check_branch
      %82 = sbr.rel (0) target = $region45
    $region44: #{model_forward.3} parent=1 // pred_region
      %84 = dma.done [#allocation3], 16
    $region45: #{model_forward.3} parent=1 // pred_fallthru
      _
    // Predicated region
    $region46: #{model_forward.3} parent=1 // pred_check
      _
    $region47: #{model_forward.3} parent=1 // pred_check_branch
      %86 = sbr.rel (0) target = $region49
    $region48: #{model_forward.3} parent=1 // pred_region
      %88 = dma.done [#allocation5], 16
    $region49: #{model_forward.3} parent=1 // pred_fallthru
      _
    // Predicated region
    $region50: #{model_forward.3} parent=1 // pred_check
      _
    $region51: #{model_forward.3} parent=1 // pred_check_branch
      %90 = sbr.rel (0) target = $region53
    $region52: #{model_forward.3} parent=1 // pred_region
      %92 = dma.done [#allocation5], 16
    $region53: #{model_forward.3} parent=1 // pred_fallthru
      _
    // Predicated region
    $region54: #{model_forward.3} parent=1 // pred_check
      _
    $region55: #{model_forward.3} parent=1 // pred_check_branch
      %94 = sbr.rel (0) target = $region57
    $region56: #{model_forward.3} parent=1 // pred_region
      %96 = dma.done [#allocation8], 16
    $region57: #{model_forward.3} parent=1 // pred_fallthru
      _
    // Predicated region
    $region58: #{model_forward.3} parent=1 // pred_check
      _
    $region59: #{model_forward.3} parent=1 // pred_check_branch
      %98 = sbr.rel (0) target = $region61
    $region60: #{model_forward.3} parent=1 // pred_region
      %100 = dma.done [#allocation8], 16
    $region61: #{model_forward.3} parent=1 // pred_fallthru
      _
    // Predicated region
    $region62: #{model_forward.3} parent=1 // pred_check
      _
    $region63: #{model_forward.3} parent=1 // pred_check_branch
      %102 = sbr.rel (0) target = $region65
    $region64: #{model_forward.3} parent=1 // pred_region
      %104 = dma.done [#allocation11], 16
    $region65: #{model_forward.3} parent=1 // pred_fallthru
      _
    %105 = sfence
    %v106 = vld [vmem:[%s8] sm:$0x3]
    %v107 = vld [vmem:[%s9] sm:$0x3]
    %vm108 = vcmp.ge.f32.partialorder %v107, 0.5
    %v109 = vmul.f32 %v106, 2.0
    %v110 = vsel %vm108, %v109, 0.0
    %s111 = sld [smem:[#allocation10]]
    %s112 = sld [smem:[#allocation9]]
    %v113 = vstv %s112
    %v114 = vmul.f32 %v113, %v110
    %v115 = vstv %s111
    %v116 = vadd.f32 %v115, %v114
    %s117 = sld [smem:[#allocation9 + $0x1]]
    %v118 = vstv %s117
    %v119 = vmul.f32 %v118, %v110
    %v121 = vrot.slane %v119, 1
    %v123 = vadd.f32 %v116, %v121
    %s124 = sld [smem:[#allocation10 + $0x1]]
    %s125 = sld [smem:[#allocation9 + $0x2]]
    %v126 = vstv %s125
    %v127 = vmul.f32 %v126, %v110
    %v128 = vstv %s124
    %v129 = vadd.f32 %v128, %v127
    %s130 = sld [smem:[#allocation9 + $0x3]]
    %v131 = vstv %s130
    %v132 = vmul.f32 %v131, %v110
    %v134 = vrot.slane %v132, 1
    %v136 = vadd.f32 %v129, %v134
    %s137 = sld [smem:[#allocation10 + $0x2]]
    %s138 = sld [smem:[#allocation9 + $0x4]]
    %v139 = vstv %s138
    %v140 = vmul.f32 %v139, %v110
    %v141 = vstv %s137
    %v142 = vadd.f32 %v141, %v140
    %s143 = sld [smem:[#allocation9 + $0x5]]
    %v144 = vstv %s143
    %v145 = vmul.f32 %v144, %v110
    %v147 = vrot.slane %v145, 1
    %v149 = vadd.f32 %v142, %v147
    %v151 = vrot.slane %v136, 7
    %v154 = vrot.slane %v149, 6
    %vm156 = vcmask 1040384
    %v157 = vsel %vm156, %v123, %v151
    %vm158 = vcmask 1041408
    %v159 = vsel %vm158, %v157, %v154
    %vm160 = vcmask 452608
    %161 = vst.msk [vmem:[%s10] sm:$0x7] %vm160, %v159
    // Predicated region
    $region66: #{model_forward.3} parent=1 // pred_check
      _
    $region67: #{model_forward.3} parent=1 // pred_check_branch
      %163 = sbr.rel (0) target = $region69
    $region68: #{model_forward.3} parent=1 // pred_region
      _
    $region69: #{model_forward.3} parent=1 // pred_fallthru
      _
    // Predicated region
    $region70: #{model_forward.3} parent=1 // pred_check
      _
    $region71: #{model_forward.3} parent=1 // pred_check_branch
      %165 = sbr.rel (0) target = $region73
    $region72: #{model_forward.3} parent=1 // pred_region
      _
    $region73: #{model_forward.3} parent=1 // pred_fallthru
      _
    %166 = vsyncpa [#allocation3], 1
    %167 = vsyncpa [#allocation5], 1
    %168 = vsyncpa [#allocation8], 1
    %169 = vsyncpa [#allocation11], 1

</llo_original>
